<compile_context>
chip_gen: v5e
topology: v5e:2x2
jax: 0.10.0
libtpu: 0.0.40
codegen_flags: <defaults>
</compile_context>

<pallas_src>
import functools

import jax
import jax.numpy as jnp
from jax.experimental import pallas as pl
from jax.experimental.pallas import tpu as pltpu


def _mlp_kernel(x_ref, w1_ref, b1_ref, w2_ref, b2_ref, w3_ref, b3_ref,
                w4_ref, b4_ref, out_ref):
    """Fused DQN-MLP forward for one (TB, input_dim) batch tile.

    Weights arrive pre-cast to bf16 (MXU-native on v6e/v7x); activations are cast
    to bf16 right before each matmul; accumulation, bias add and ReLU stay f32.
    """
    h = x_ref[...]                                                   # (TB, in) f32
    h = jnp.dot(h.astype(jnp.bfloat16), w1_ref[...],
                preferred_element_type=jnp.float32) + b1_ref[...]
    h = jnp.maximum(h, 0.0)
    h = jnp.dot(h.astype(jnp.bfloat16), w2_ref[...],
                preferred_element_type=jnp.float32) + b2_ref[...]
    h = jnp.maximum(h, 0.0)
    h = jnp.dot(h.astype(jnp.bfloat16), w3_ref[...],
                preferred_element_type=jnp.float32) + b3_ref[...]
    h = jnp.maximum(h, 0.0)
    h = jnp.dot(h.astype(jnp.bfloat16), w4_ref[...],
                preferred_element_type=jnp.float32) + b4_ref[...]
    out_ref[...] = h.astype(out_ref.dtype)
    # TODO(synk): n_action < 128 -> masked partial stores; a lane-padded output slab
    # would be marginally faster at huge batch, but output bytes are negligible here.


def _round_up(x, m):
    return (x + m - 1) // m * m


def _resident_spec(shape):
    """Full-array block with a constant block index -> DMA'd once, stays in VMEM.

    Rank is bound here (per call), avoiding the late-binding-lambda trap of building
    index_maps inside a list comprehension.
    """
    nd = len(shape)
    return pl.BlockSpec(shape, lambda i, _nd=nd: (0,) * _nd)


@functools.partial(jax.jit, static_argnames=("block_b",))
def network_forward(x, params, block_b=256):
    """Run the fused DQN MLP Pallas kernel.

    x:       (B, input_dim) float32
    params:  dict of w1..w4 (in, out) and b1..b4 (1, out) float32 arrays.
    block_b: max batch-tile rows (multiple of 8; 256 fills the v6e/v7x MXU).
    """
    b_dim, input_dim = x.shape
    n_action = params["w4"].shape[1]

    # Batch tile: at least 8 rows (sublane multiple), at most block_b.
    tb = min(block_b, _round_up(b_dim, 8))
    padded_b = _round_up(b_dim, tb)
    if padded_b != b_dim:
        x = jnp.pad(x, ((0, padded_b - b_dim), (0, 0)))

    # Cast weights to bf16 once (MXU-native on v6e/v7x, halves weight DMA/VMEM);
    # keep biases f32 for the VPU-side add (v5e VPU has no bf16).
    ws = tuple(params[f"w{i}"].astype(jnp.bfloat16) for i in range(1, 5))
    bs = tuple(params[f"b{i}"].astype(jnp.float32) for i in range(1, 5))
    operands = (x, ws[0], bs[0], ws[1], bs[1], ws[2], bs[2], ws[3], bs[3])

    in_specs = [pl.BlockSpec((tb, input_dim), lambda i: (i, 0))]      # batch-tiled x
    in_specs += [_resident_spec(op.shape) for op in operands[1:]]     # resident params
    out_spec = pl.BlockSpec((tb, n_action), lambda i: (i, 0))

    out = pl.pallas_call(
        _mlp_kernel,
        out_shape=jax.ShapeDtypeStruct((padded_b, n_action), jnp.float32),
        grid_spec=pltpu.PrefetchScalarGridSpec(
            num_scalar_prefetch=0,
            grid=(padded_b // tb,),
            in_specs=in_specs,
            out_specs=out_spec,
        ),
        compiler_params=pltpu.CompilerParams(
            dimension_semantics=("parallel",),   # shards batch tiles over v7x's 2 TCs
        ),
    )(*operands)

    return out[:b_dim]


def init_params(key, input_dim, n_action):
    """Deterministic init mimicking nn.Linear default (uniform +-1/sqrt(fan_in))."""
    sizes = [(input_dim, 256), (256, 128), (128, 64), (64, n_action)]
    params = {}
    for i, (fan_in, fan_out) in enumerate(sizes, start=1):
        key, kw, kb = jax.random.split(key, 3)
        bound = 1.0 / jnp.sqrt(float(fan_in))
        params[f"w{i}"] = jax.random.uniform(
            kw, (fan_in, fan_out), jnp.float32, minval=-bound, maxval=bound)
        params[f"b{i}"] = jax.random.uniform(
            kb, (1, fan_out), jnp.float32, minval=-bound, maxval=bound)
    return params


def reference_forward(x, params):
    """Plain-JAX f32 reference matching the PyTorch forward semantics."""
    h = jnp.maximum(x @ params["w1"] + params["b1"], 0.0)
    h = jnp.maximum(h @ params["w2"] + params["b2"], 0.0)
    h = jnp.maximum(h @ params["w3"] + params["b3"], 0.0)
    return h @ params["w4"] + params["b4"]


if __name__ == "__main__":
    key = jax.random.PRNGKey(0)
    batch, input_dim, n_action = 2, 16, 4

    kx, kp, kx2 = jax.random.split(key, 3)
    params = init_params(kp, input_dim, n_action)

    # Small acting-path batch (latency-bound; single 8-row tile).
    x = jax.random.normal(kx, (batch, input_dim), jnp.float32)
    out = jax.block_until_ready(network_forward(x, params))
    ref = reference_forward(x, params)
    assert out.shape == (batch, n_action)
    # bf16 matmul inputs -> compare against the full-f32 reference with loose tolerance.
    assert jnp.allclose(out, ref, atol=5e-2, rtol=5e-2), "mismatch vs reference (small batch)"

    # Larger, non-multiple-of-tile batch: exercises the batch grid + padding path.
    big_batch = 300
    xb = jax.random.normal(kx2, (big_batch, input_dim), jnp.float32)
    outb = jax.block_until_ready(network_forward(xb, params))
    refb = reference_forward(xb, params)
    assert outb.shape == (big_batch, n_action)
    assert jnp.allclose(outb, refb, atol=5e-2, rtol=5e-2), "mismatch vs reference (big batch)"

    print("KERNEL_OK")
</pallas_src>

<mosaic_0001>
module attributes {stable_mosaic.version = 11 : i64} {
  func.func @_mlp_kernel(%arg0: i32, %arg1: memref<8x16xf32, #tpu.memory_space<vmem>>, %arg2: memref<16x256xbf16, #tpu.memory_space<vmem>>, %arg3: memref<1x256xf32, #tpu.memory_space<vmem>>, %arg4: memref<256x128xbf16, #tpu.memory_space<vmem>>, %arg5: memref<1x128xf32, #tpu.memory_space<vmem>>, %arg6: memref<128x64xbf16, #tpu.memory_space<vmem>>, %arg7: memref<1x64xf32, #tpu.memory_space<vmem>>, %arg8: memref<64x4xbf16, #tpu.memory_space<vmem>>, %arg9: memref<1x4xf32, #tpu.memory_space<vmem>>, %arg10: memref<8x4xf32, #tpu.memory_space<vmem>>) attributes {dimension_semantics = [#tpu.dimension_semantics<parallel>], iteration_bounds = array<i64: 1>, scalar_prefetch = 0 : i64, scratch_operands = 0 : i64, tpu.core_type = #tpu.core_type<tc>, window_params = [{transform_indices = @transform_0, window_bounds = array<i64: 8, 16>}, {pipeline_mode = #tpu.pipeline_mode<synchronous>, transform_indices = @transform_1, window_bounds = array<i64: 16, 256>}, {pipeline_mode = #tpu.pipeline_mode<synchronous>, transform_indices = @transform_2, window_bounds = array<i64: 1, 256>}, {pipeline_mode = #tpu.pipeline_mode<synchronous>, transform_indices = @transform_3, window_bounds = array<i64: 256, 128>}, {pipeline_mode = #tpu.pipeline_mode<synchronous>, transform_indices = @transform_4, window_bounds = array<i64: 1, 128>}, {pipeline_mode = #tpu.pipeline_mode<synchronous>, transform_indices = @transform_5, window_bounds = array<i64: 128, 64>}, {pipeline_mode = #tpu.pipeline_mode<synchronous>, transform_indices = @transform_6, window_bounds = array<i64: 1, 64>}, {pipeline_mode = #tpu.pipeline_mode<synchronous>, transform_indices = @transform_7, window_bounds = array<i64: 64, 4>}, {pipeline_mode = #tpu.pipeline_mode<synchronous>, transform_indices = @transform_8, window_bounds = array<i64: 1, 4>}, {transform_indices = @transform_9, window_bounds = array<i64: 8, 4>}]} {
    %c0 = arith.constant 0 : index
    %c0_0 = arith.constant 0 : index
    %0 = vector.load %arg1[%c0, %c0_0] : memref<8x16xf32, #tpu.memory_space<vmem>>, vector<8x16xf32>
    %1 = arith.truncf %0 : vector<8x16xf32> to vector<8x16xbf16>
    %c0_1 = arith.constant 0 : index
    %c0_2 = arith.constant 0 : index
    %2 = vector.load %arg2[%c0_1, %c0_2] : memref<16x256xbf16, #tpu.memory_space<vmem>>, vector<16x256xbf16>
    %cst = arith.constant dense<0.000000e+00> : vector<8x256xf32>
    %3 = tpu.matmul %1, %2, %cst {dimension_numbers = #tpu.dot_dimension_numbers<[1], [0], [0], [1], [0, 0, 1, 1], [], []>} : vector<8x16xbf16>, vector<16x256xbf16>, vector<8x256xf32> -> vector<8x256xf32>
    %c0_3 = arith.constant 0 : index
    %c0_4 = arith.constant 0 : index
    %4 = vector.load %arg3[%c0_3, %c0_4] : memref<1x256xf32, #tpu.memory_space<vmem>>, vector<1x256xf32>
    %5 = vector.broadcast %4 : vector<1x256xf32> to vector<8x256xf32>
    %6 = arith.addf %3, %5 : vector<8x256xf32>
    %cst_5 = arith.constant 0.000000e+00 : f32
    %7 = vector.broadcast %cst_5 : f32 to vector<8x256xf32>
    %8 = arith.maximumf %6, %7 : vector<8x256xf32>
    %9 = arith.truncf %8 : vector<8x256xf32> to vector<8x256xbf16>
    %c0_6 = arith.constant 0 : index
    %c0_7 = arith.constant 0 : index
    %10 = vector.load %arg4[%c0_6, %c0_7] : memref<256x128xbf16, #tpu.memory_space<vmem>>, vector<256x128xbf16>
    %cst_8 = arith.constant dense<0.000000e+00> : vector<8x128xf32>
    %11 = tpu.matmul %9, %10, %cst_8 {dimension_numbers = #tpu.dot_dimension_numbers<[1], [0], [0], [1], [0, 0, 1, 1], [], []>} : vector<8x256xbf16>, vector<256x128xbf16>, vector<8x128xf32> -> vector<8x128xf32>
    %c0_9 = arith.constant 0 : index
    %c0_10 = arith.constant 0 : index
    %12 = vector.load %arg5[%c0_9, %c0_10] : memref<1x128xf32, #tpu.memory_space<vmem>>, vector<1x128xf32>
    %13 = vector.broadcast %12 : vector<1x128xf32> to vector<8x128xf32>
    %14 = arith.addf %11, %13 : vector<8x128xf32>
    %cst_11 = arith.constant 0.000000e+00 : f32
    %15 = vector.broadcast %cst_11 : f32 to vector<8x128xf32>
    %16 = arith.maximumf %14, %15 : vector<8x128xf32>
    %17 = arith.truncf %16 : vector<8x128xf32> to vector<8x128xbf16>
    %c0_12 = arith.constant 0 : index
    %c0_13 = arith.constant 0 : index
    %18 = vector.load %arg6[%c0_12, %c0_13] : memref<128x64xbf16, #tpu.memory_space<vmem>>, vector<128x64xbf16>
    %cst_14 = arith.constant dense<0.000000e+00> : vector<8x64xf32>
    %19 = tpu.matmul %17, %18, %cst_14 {dimension_numbers = #tpu.dot_dimension_numbers<[1], [0], [0], [1], [0, 0, 1, 1], [], []>} : vector<8x128xbf16>, vector<128x64xbf16>, vector<8x64xf32> -> vector<8x64xf32>
    %c0_15 = arith.constant 0 : index
    %c0_16 = arith.constant 0 : index
    %20 = vector.load %arg7[%c0_15, %c0_16] : memref<1x64xf32, #tpu.memory_space<vmem>>, vector<1x64xf32>
    %21 = vector.broadcast %20 : vector<1x64xf32> to vector<8x64xf32>
    %22 = arith.addf %19, %21 : vector<8x64xf32>
    %cst_17 = arith.constant 0.000000e+00 : f32
    %23 = vector.broadcast %cst_17 : f32 to vector<8x64xf32>
    %24 = arith.maximumf %22, %23 : vector<8x64xf32>
    %25 = arith.truncf %24 : vector<8x64xf32> to vector<8x64xbf16>
    %c0_18 = arith.constant 0 : index
    %c0_19 = arith.constant 0 : index
    %26 = vector.load %arg8[%c0_18, %c0_19] : memref<64x4xbf16, #tpu.memory_space<vmem>>, vector<64x4xbf16>
    %cst_20 = arith.constant dense<0.000000e+00> : vector<8x4xf32>
    %27 = tpu.matmul %25, %26, %cst_20 {dimension_numbers = #tpu.dot_dimension_numbers<[1], [0], [0], [1], [0, 0, 1, 1], [], []>} : vector<8x64xbf16>, vector<64x4xbf16>, vector<8x4xf32> -> vector<8x4xf32>
    %c0_21 = arith.constant 0 : index
    %c0_22 = arith.constant 0 : index
    %28 = vector.load %arg9[%c0_21, %c0_22] : memref<1x4xf32, #tpu.memory_space<vmem>>, vector<1x4xf32>
    %29 = vector.broadcast %28 : vector<1x4xf32> to vector<8x4xf32>
    %30 = arith.addf %27, %29 : vector<8x4xf32>
    %c0_23 = arith.constant 0 : index
    %c0_24 = arith.constant 0 : index
    %31 = vector.load %arg10[%c0_23, %c0_24] : memref<8x4xf32, #tpu.memory_space<vmem>>, vector<8x4xf32>
    tpu.vector_store %arg10[%c0_23, %c0_24], %30 {strides = array<i32>} : memref<8x4xf32, #tpu.memory_space<vmem>>, vector<8x4xf32>,
    return
  }
  func.func @transform_0(%arg0: i32) -> (i32, i32) {
    %c0_i32 = arith.constant 0 : i32
    %c0_i32_0 = arith.constant 0 : i32
    return %arg0, %c0_i32 : i32, i32
  }
  func.func @transform_1(%arg0: i32) -> (i32, i32) {
    %c0_i32 = arith.constant 0 : i32
    %c0_i32_0 = arith.constant 0 : i32
    %c0_i32_1 = arith.constant 0 : i32
    return %c0_i32, %c0_i32_0 : i32, i32
  }
  func.func @transform_2(%arg0: i32) -> (i32, i32) {
    %c0_i32 = arith.constant 0 : i32
    %c0_i32_0 = arith.constant 0 : i32
    %c0_i32_1 = arith.constant 0 : i32
    return %c0_i32, %c0_i32_0 : i32, i32
  }
  func.func @transform_3(%arg0: i32) -> (i32, i32) {
    %c0_i32 = arith.constant 0 : i32
    %c0_i32_0 = arith.constant 0 : i32
    %c0_i32_1 = arith.constant 0 : i32
    return %c0_i32, %c0_i32_0 : i32, i32
  }
  func.func @transform_4(%arg0: i32) -> (i32, i32) {
    %c0_i32 = arith.constant 0 : i32
    %c0_i32_0 = arith.constant 0 : i32
    %c0_i32_1 = arith.constant 0 : i32
    return %c0_i32, %c0_i32_0 : i32, i32
  }
  func.func @transform_5(%arg0: i32) -> (i32, i32) {
    %c0_i32 = arith.constant 0 : i32
    %c0_i32_0 = arith.constant 0 : i32
    %c0_i32_1 = arith.constant 0 : i32
    return %c0_i32, %c0_i32_0 : i32, i32
  }
  func.func @transform_6(%arg0: i32) -> (i32, i32) {
    %c0_i32 = arith.constant 0 : i32
    %c0_i32_0 = arith.constant 0 : i32
    %c0_i32_1 = arith.constant 0 : i32
    return %c0_i32, %c0_i32_0 : i32, i32
  }
  func.func @transform_7(%arg0: i32) -> (i32, i32) {
    %c0_i32 = arith.constant 0 : i32
    %c0_i32_0 = arith.constant 0 : i32
    %c0_i32_1 = arith.constant 0 : i32
    return %c0_i32, %c0_i32_0 : i32, i32
  }
  func.func @transform_8(%arg0: i32) -> (i32, i32) {
    %c0_i32 = arith.constant 0 : i32
    %c0_i32_0 = arith.constant 0 : i32
    %c0_i32_1 = arith.constant 0 : i32
    return %c0_i32, %c0_i32_0 : i32, i32
  }
  func.func @transform_9(%arg0: i32) -> (i32, i32) {
    %c0_i32 = arith.constant 0 : i32
    %c0_i32_0 = arith.constant 0 : i32
    return %arg0, %c0_i32 : i32, i32
  }
}

</mosaic_0001>

<llo_original>
// kernel: network_forward.1
$region0: #{network_forward.1}
  #allocation0 [shape = 'u32[]', space=smem, size = 0x4, offset = 0x4, fixed_abs, tag = 'smem constant byte address 0x4 - core index']
  #allocation1 [shape = 'u32[72,128]{1,0:T(1,128)}', space=vmem, size = 0x9000, scoped, tag = 'internal scratch']
  %s0 = inlined_call_operand.vmem [shape: f32[8,16], index: 0, kind: input, shape index: {}]
  %s1 = inlined_call_operand.vmem [shape: bf16[16,256], index: 1, kind: input, shape index: {}]
  %s2 = inlined_call_operand.vmem [shape: f32[1,256], index: 2, kind: input, shape index: {}]
  %s3 = inlined_call_operand.vmem [shape: bf16[256,128], index: 3, kind: input, shape index: {}]
  %s4 = inlined_call_operand.vmem [shape: f32[1,128], index: 4, kind: input, shape index: {}]
  %s5 = inlined_call_operand.vmem [shape: bf16[128,64], index: 5, kind: input, shape index: {}]
  %s6 = inlined_call_operand.vmem [shape: f32[1,64], index: 6, kind: input, shape index: {}]
  %s7 = inlined_call_operand.vmem [shape: bf16[64,4], index: 7, kind: input, shape index: {}]
  %s8 = inlined_call_operand.vmem [shape: f32[1,4], index: 8, kind: input, shape index: {}]
  %s9 = inlined_call_operand.vmem [shape: f32[8,4], index: 9, kind: output, shape index: {}]
  %s10 = sld [smem:[#allocation0]]
  $region46: #{network_forward.1} parent=0
    _
  %s12 = ssub.s32 1, %s10
  %s13 = scalar_select 0, %s12, %s10
  // Predicated region
  $region2: #{network_forward.1} parent=0 // pred_check
    _
  $region3: #{network_forward.1} parent=0 // pred_check_branch
    %15 = sbr.rel (0) target = $region5
  $region4: #{network_forward.1} parent=0 // pred_region
    _
  $region5: #{network_forward.1} parent=0 // pred_fallthru
    _
  // Predicated region
  $region6: #{network_forward.1} parent=0 // pred_check
    _
  $region7: #{network_forward.1} parent=0 // pred_check_branch
    %17 = sbr.rel (0) target = $region9
  $region8: #{network_forward.1} parent=0 // pred_region
    _
  $region9: #{network_forward.1} parent=0 // pred_fallthru
    _
  // Predicated region
  $region10: #{network_forward.1} parent=0 // pred_check
    _
  $region11: #{network_forward.1} parent=0 // pred_check_branch
    %19 = sbr.rel (0) target = $region13
  $region12: #{network_forward.1} parent=0 // pred_region
    _
  $region13: #{network_forward.1} parent=0 // pred_fallthru
    _
  // Predicated region
  $region14: #{network_forward.1} parent=0 // pred_check
    _
  $region15: #{network_forward.1} parent=0 // pred_check_branch
    %21 = sbr.rel (0) target = $region17
  $region16: #{network_forward.1} parent=0 // pred_region
    _
  $region17: #{network_forward.1} parent=0 // pred_fallthru
    _
  // Predicated region
  $region18: #{network_forward.1} parent=0 // pred_check
    _
  $region19: #{network_forward.1} parent=0 // pred_check_branch
    %23 = sbr.rel (0) target = $region21
  $region20: #{network_forward.1} parent=0 // pred_region
    _
  $region21: #{network_forward.1} parent=0 // pred_fallthru
    _
  // Predicated region
  $region22: #{network_forward.1} parent=0 // pred_check
    _
  $region23: #{network_forward.1} parent=0 // pred_check_branch
    %25 = sbr.rel (0) target = $region25
  $region24: #{network_forward.1} parent=0 // pred_region
    _
  $region25: #{network_forward.1} parent=0 // pred_fallthru
    _
  // Predicated region
  $region26: #{network_forward.1} parent=0 // pred_check
    _
  $region27: #{network_forward.1} parent=0 // pred_check_branch
    %27 = sbr.rel (0) target = $region29
  $region28: #{network_forward.1} parent=0 // pred_region
    _
  $region29: #{network_forward.1} parent=0 // pred_fallthru
    _
  // Predicated region
  $region30: #{network_forward.1} parent=0 // pred_check
    _
  $region31: #{network_forward.1} parent=0 // pred_check_branch
    %29 = sbr.rel (0) target = $region33
  $region32: #{network_forward.1} parent=0 // pred_region
    _
  $region33: #{network_forward.1} parent=0 // pred_fallthru
    _
  // Predicated region
  $region34: #{network_forward.1} parent=0 // pred_check
    _
  $region35: #{network_forward.1} parent=0 // pred_check_branch
    %31 = sbr.rel (0) target = $region37
  $region36: #{network_forward.1} parent=0 // pred_region
    _
  $region37: #{network_forward.1} parent=0 // pred_fallthru
    _
  %v33 = vld [vmem:[%s0] sm:$0xff]
  %v34 = vpack.c.bf16 %v33, %v33
  %v35 = vld [vmem:[%s1] sm:$0xff]
  %v36 = vld [vmem:[%s1 + $0x8] sm:$0xff]
  %v37 = vld [vmem:[%s2] sm:$0x3]
  %v39 = vperm.slane %v37, 0
  %v40 = vperm.slane %v37, 1
  %v45 = vunpack.c.l.b16 %v35
  %v46 = vunpack.c.h.b16 %v35
  %v47 = vunpack.c.l.b16 %v36
  %v48 = vunpack.c.h.b16 %v36
  %v49 = vpack.c.b16 %v47, %v45
  %v50 = vpack.c.b16 %v48, %v46
  %vm53 = vcmask 130048
  %v55 = vsel %vm53, %v34, 0
  %57 = vmatpush.bf16.msra.mxu0 0
  %58 = vmatpush.bf16.msra.mxu0 0
  %59 = vmatpush.bf16.msra.mxu0 0
  %60 = vmatpush.bf16.msra.mxu0 0
  %61 = vmatpush.bf16.msra.mxu0 0
  %62 = vmatpush.bf16.msra.mxu0 0
  %63 = vmatpush.bf16.msra.mxu0 0
  %64 = vmatpush.bf16.msra.mxu0 %v49
  %65 = vmatmul.bf16.gmra.mxu0 %v55
  %v66 = vpop.f32.mrf.mxu0
  %v67 = vadd.f32 %v39, %v66
  %v68 = vpop.f32.mrf.mxu0
  %69 = vdwg.mxu0
  %70 = vmatpush.bf16.msra.mxu0 0
  %71 = vmatpush.bf16.msra.mxu0 0
  %72 = vmatpush.bf16.msra.mxu0 0
  %73 = vmatpush.bf16.msra.mxu0 0
  %74 = vmatpush.bf16.msra.mxu0 0
  %75 = vmatpush.bf16.msra.mxu0 0
  %76 = vmatpush.bf16.msra.mxu0 0
  %77 = vmatpush.bf16.msra.mxu0 %v50
  %78 = vmatmul.bf16.gmra.mxu0 %v55
  %v79 = vpop.f32.mrf.mxu0
  %v80 = vadd.f32 %v40, %v79
  %v81 = vpop.f32.mrf.mxu0
  %82 = vdwg.mxu0
  %v83 = vmax.f32 %v67, 0.0
  %v84 = vmax.f32 %v80, 0.0
  %v85 = vpack.c.bf16 %v83, %v83
  %v86 = vpack.c.bf16 %v84, %v84
  %v87 = vld [vmem:[%s3] sm:$0xf]
  %v88 = vld [vmem:[%s3 + $0x4] sm:$0xf]
  %v89 = vld [vmem:[%s3 + $0x8] sm:$0xf]
  %v90 = vld [vmem:[%s3 + $0xc] sm:$0xf]
  %v91 = vld [vmem:[%s3 + $0x10] sm:$0xf]
  %v92 = vld [vmem:[%s3 + $0x14] sm:$0xf]
  %v93 = vld [vmem:[%s3 + $0x18] sm:$0xf]
  %v94 = vld [vmem:[%s3 + $0x1c] sm:$0xf]
  %v95 = vld [vmem:[%s3 + $0x20] sm:$0xf]
  %v96 = vld [vmem:[%s3 + $0x24] sm:$0xf]
  %v97 = vld [vmem:[%s3 + $0x28] sm:$0xf]
  %v98 = vld [vmem:[%s3 + $0x2c] sm:$0xf]
  %v99 = vld [vmem:[%s3 + $0x30] sm:$0xf]
  %v100 = vld [vmem:[%s3 + $0x34] sm:$0xf]
  %v101 = vld [vmem:[%s3 + $0x38] sm:$0xf]
  %v102 = vld [vmem:[%s3 + $0x3c] sm:$0xf]
  %v103 = vld [vmem:[%s3 + $0x40] sm:$0xf]
  %v104 = vld [vmem:[%s3 + $0x44] sm:$0xf]
  %v105 = vld [vmem:[%s3 + $0x48] sm:$0xf]
  %v106 = vld [vmem:[%s3 + $0x4c] sm:$0xf]
  %v107 = vld [vmem:[%s3 + $0x50] sm:$0xf]
  %v108 = vld [vmem:[%s3 + $0x54] sm:$0xf]
  %v109 = vld [vmem:[%s3 + $0x58] sm:$0xf]
  %v110 = vld [vmem:[%s3 + $0x5c] sm:$0xf]
  %v111 = vld [vmem:[%s3 + $0x60] sm:$0xf]
  %v112 = vld [vmem:[%s3 + $0x64] sm:$0xf]
  %v113 = vld [vmem:[%s3 + $0x68] sm:$0xf]
  %v114 = vld [vmem:[%s3 + $0x6c] sm:$0xf]
  %v115 = vld [vmem:[%s3 + $0x70] sm:$0xf]
  %v116 = vld [vmem:[%s3 + $0x74] sm:$0xf]
  %v117 = vld [vmem:[%s3 + $0x78] sm:$0xf]
  %v118 = vld [vmem:[%s3 + $0x7c] sm:$0xf]
  %v119 = vld [vmem:[%s4] sm:$0x1]
  %v121 = vperm.slane %v119, 0
  %v155 = vunpack.c.l.b16 %v87
  %v156 = vunpack.c.l.b16 %v88
  %v157 = vunpack.c.l.b16 %v89
  %v158 = vunpack.c.l.b16 %v90
  %v159 = vunpack.c.l.b16 %v91
  %v160 = vunpack.c.l.b16 %v92
  %v161 = vunpack.c.l.b16 %v93
  %v162 = vunpack.c.l.b16 %v94
  %v163 = vunpack.c.l.b16 %v95
  %v164 = vunpack.c.l.b16 %v96
  %v165 = vunpack.c.l.b16 %v97
  %v166 = vunpack.c.l.b16 %v98
  %v167 = vunpack.c.l.b16 %v99
  %v168 = vunpack.c.l.b16 %v100
  %v169 = vunpack.c.l.b16 %v101
  %v170 = vunpack.c.l.b16 %v102
  %v171 = vunpack.c.l.b16 %v103
  %v172 = vunpack.c.l.b16 %v104
  %v173 = vunpack.c.l.b16 %v105
  %v174 = vunpack.c.l.b16 %v106
  %v175 = vunpack.c.l.b16 %v107
  %v176 = vunpack.c.l.b16 %v108
  %v177 = vunpack.c.l.b16 %v109
  %v178 = vunpack.c.l.b16 %v110
  %v179 = vunpack.c.l.b16 %v111
  %v180 = vunpack.c.l.b16 %v112
  %v181 = vunpack.c.l.b16 %v113
  %v182 = vunpack.c.l.b16 %v114
  %v183 = vunpack.c.l.b16 %v115
  %v184 = vunpack.c.l.b16 %v116
  %v185 = vunpack.c.l.b16 %v117
  %v186 = vunpack.c.l.b16 %v118
  %v187 = vpack.c.b16 %v156, %v155
  %v188 = vpack.c.b16 %v158, %v157
  %v189 = vpack.c.b16 %v160, %v159
  %v190 = vpack.c.b16 %v162, %v161
  %v191 = vpack.c.b16 %v164, %v163
  %v192 = vpack.c.b16 %v166, %v165
  %v193 = vpack.c.b16 %v168, %v167
  %v194 = vpack.c.b16 %v170, %v169
  %v195 = vpack.c.b16 %v172, %v171
  %v196 = vpack.c.b16 %v174, %v173
  %v197 = vpack.c.b16 %v176, %v175
  %v198 = vpack.c.b16 %v178, %v177
  %v199 = vpack.c.b16 %v180, %v179
  %v200 = vpack.c.b16 %v182, %v181
  %v201 = vpack.c.b16 %v184, %v183
  %v202 = vpack.c.b16 %v186, %v185
  %219 = vmatpush.bf16.msra.mxu0 %v194
  %220 = vmatpush.bf16.msra.mxu0 %v193
  %221 = vmatpush.bf16.msra.mxu0 %v192
  %222 = vmatpush.bf16.msra.mxu0 %v191
  %223 = vmatpush.bf16.msra.mxu0 %v190
  %224 = vmatpush.bf16.msra.mxu0 %v189
  %225 = vmatpush.bf16.msra.mxu0 %v188
  %226 = vmatpush.bf16.msra.mxu0 %v187
  %227 = vmatmul.bf16.gmra.mxu0 %v85
  %v228 = vpop.f32.mrf.mxu0
  %v229 = vadd.f32 %v121, %v228
  %v230 = vpop.f32.mrf.mxu0
  %231 = vdwg.mxu0
  %232 = vmatpush.bf16.msra.mxu0 %v202
  %233 = vmatpush.bf16.msra.mxu0 %v201
  %234 = vmatpush.bf16.msra.mxu0 %v200
  %235 = vmatpush.bf16.msra.mxu0 %v199
  %236 = vmatpush.bf16.msra.mxu0 %v198
  %237 = vmatpush.bf16.msra.mxu0 %v197
  %238 = vmatpush.bf16.msra.mxu0 %v196
  %239 = vmatpush.bf16.msra.mxu0 %v195
  %240 = vmatmul.bf16.gmra.mxu0 %v86
  %v241 = vpop.f32.mrf.mxu0
  %v242 = vadd.f32 %v229, %v241
  %v243 = vpop.f32.mrf.mxu0
  %244 = vdwg.mxu0
  %v245 = vmax.f32 %v242, 0.0
  %v246 = vpack.c.bf16 %v245, %v245
  %v247 = vld [vmem:[%s5] sm:$0xf]
  %v248 = vld [vmem:[%s5 + $0x4] sm:$0xf]
  %v249 = vld [vmem:[%s5 + $0x8] sm:$0xf]
  %v250 = vld [vmem:[%s5 + $0xc] sm:$0xf]
  %v251 = vld [vmem:[%s5 + $0x10] sm:$0xf]
  %v252 = vld [vmem:[%s5 + $0x14] sm:$0xf]
  %v253 = vld [vmem:[%s5 + $0x18] sm:$0xf]
  %v254 = vld [vmem:[%s5 + $0x1c] sm:$0xf]
  %v255 = vld [vmem:[%s5 + $0x20] sm:$0xf]
  %v256 = vld [vmem:[%s5 + $0x24] sm:$0xf]
  %v257 = vld [vmem:[%s5 + $0x28] sm:$0xf]
  %v258 = vld [vmem:[%s5 + $0x2c] sm:$0xf]
  %v259 = vld [vmem:[%s5 + $0x30] sm:$0xf]
  %v260 = vld [vmem:[%s5 + $0x34] sm:$0xf]
  %v261 = vld [vmem:[%s5 + $0x38] sm:$0xf]
  %v262 = vld [vmem:[%s5 + $0x3c] sm:$0xf]
  %v263 = vld [vmem:[%s6] sm:$0x1]
  %v265 = vperm.slane %v263, 0
  %v283 = vunpack.c.l.b16 %v247
  %v284 = vunpack.c.l.b16 %v248
  %v285 = vunpack.c.l.b16 %v249
  %v286 = vunpack.c.l.b16 %v250
  %v287 = vunpack.c.l.b16 %v251
  %v288 = vunpack.c.l.b16 %v252
  %v289 = vunpack.c.l.b16 %v253
  %v290 = vunpack.c.l.b16 %v254
  %v291 = vunpack.c.l.b16 %v255
  %v292 = vunpack.c.l.b16 %v256
  %v293 = vunpack.c.l.b16 %v257
  %v294 = vunpack.c.l.b16 %v258
  %v295 = vunpack.c.l.b16 %v259
  %v296 = vunpack.c.l.b16 %v260
  %v297 = vunpack.c.l.b16 %v261
  %v298 = vunpack.c.l.b16 %v262
  %v299 = vpack.c.b16 %v284, %v283
  %v300 = vpack.c.b16 %v286, %v285
  %v301 = vpack.c.b16 %v288, %v287
  %v302 = vpack.c.b16 %v290, %v289
  %v303 = vpack.c.b16 %v292, %v291
  %v304 = vpack.c.b16 %v294, %v293
  %v305 = vpack.c.b16 %v296, %v295
  %v306 = vpack.c.b16 %v298, %v297
  %315 = vmatpush.bf16.msra.mxu0 %v306
  %316 = vmatpush.bf16.msra.mxu0 %v305
  %317 = vmatpush.bf16.msra.mxu0 %v304
  %318 = vmatpush.bf16.msra.mxu0 %v303
  %319 = vmatpush.bf16.msra.mxu0 %v302
  %320 = vmatpush.bf16.msra.mxu0 %v301
  %321 = vmatpush.bf16.msra.mxu0 %v300
  %322 = vmatpush.bf16.msra.mxu0 %v299
  %323 = vmatmul.bf16.gmra.mxu0 %v246
  %v324 = vpop.f32.mrf.mxu0
  %v325 = vadd.f32 %v265, %v324
  %v326 = vpop.f32.mrf.mxu0
  %327 = vdwg.mxu0
  %v328 = vmax.f32 %v325, 0.0
  %v329 = vpack.c.bf16 %v328, %v328
  %v330 = vld [vmem:[%s7] sm:$0xf]
  %v331 = vld [vmem:[%s7 + $0x4] sm:$0xf]
  %v332 = vld [vmem:[%s7 + $0x8] sm:$0xf]
  %v333 = vld [vmem:[%s7 + $0xc] sm:$0xf]
  %v334 = vld [vmem:[%s7 + $0x10] sm:$0xf]
  %v335 = vld [vmem:[%s7 + $0x14] sm:$0xf]
  %v336 = vld [vmem:[%s7 + $0x18] sm:$0xf]
  %v337 = vld [vmem:[%s7 + $0x1c] sm:$0xf]
  %v338 = vld [vmem:[%s8] sm:$0x1]
  %v340 = vperm.slane %v338, 0
  %v350 = vunpack.c.l.b16 %v330
  %v351 = vunpack.c.l.b16 %v331
  %v352 = vunpack.c.l.b16 %v332
  %v353 = vunpack.c.l.b16 %v333
  %v354 = vunpack.c.l.b16 %v334
  %v355 = vunpack.c.l.b16 %v335
  %v356 = vunpack.c.l.b16 %v336
  %v357 = vunpack.c.l.b16 %v337
  %v358 = vpack.c.b16 %v351, %v350
  %v359 = vpack.c.b16 %v353, %v352
  %v360 = vpack.c.b16 %v355, %v354
  %v361 = vpack.c.b16 %v357, %v356
  %vm366 = vcmask 523264
  %v368 = vsel %vm366, %v329, 0
  %370 = vmatpush.bf16.msra.mxu0 0
  %371 = vmatpush.bf16.msra.mxu0 0
  %372 = vmatpush.bf16.msra.mxu0 0
  %373 = vmatpush.bf16.msra.mxu0 0
  %374 = vmatpush.bf16.msra.mxu0 %v361
  %375 = vmatpush.bf16.msra.mxu0 %v360
  %376 = vmatpush.bf16.msra.mxu0 %v359
  %377 = vmatpush.bf16.msra.mxu0 %v358
  %378 = vmatmul.bf16.gmra.mxu0 %v368
  %v379 = vpop.f32.mrf.mxu0
  %v380 = vadd.f32 %v340, %v379
  %v381 = vpop.f32.mrf.mxu0
  %382 = vdwg.mxu0
  %vm383 = vcmask 31744
  %384 = vst.msk [vmem:[%s9] sm:$0xff] %vm383, %v380
  // Predicated region
  $region38: #{network_forward.1} parent=0 // pred_check
    _
  $region39: #{network_forward.1} parent=0 // pred_check_branch
    %386 = sbr.rel (0) target = $region41
  $region40: #{network_forward.1} parent=0 // pred_region
    _
  $region41: #{network_forward.1} parent=0 // pred_fallthru
    _
  // Predicated region
  $region42: #{network_forward.1} parent=0 // pred_check
    _
  $region43: #{network_forward.1} parent=0 // pred_check_branch
    %388 = sbr.rel (0) target = $region45
  $region44: #{network_forward.1} parent=0 // pred_region
    _
  $region45: #{network_forward.1} parent=0 // pred_fallthru
    _

</llo_original>
